<compile_context>
chip_gen: v7x
topology: tpu7x:2x2x1
jax: 0.10.0
libtpu: 0.0.40
codegen_flags: <defaults>
</compile_context>

<pallas_src>
import functools

import jax
import jax.numpy as jnp
from jax import lax
from jax.scipy.linalg import solve_triangular
from jax.experimental import pallas as pl
from jax.experimental.pallas import tpu as pltpu


_VMEM_LIMIT = 32 * 1024 * 1024  # safe on v5e/v6e (128 MiB) and v7x (64 MiB physical)


def _round_up(n, m):
    return ((n + m - 1) // m) * m


def _choose_tile(n, target, granule):
    """Pick a tile size (multiple of `granule`) and a padded extent it divides."""
    if n >= target:
        return target, _round_up(n, target)
    t = _round_up(n, granule)
    return t, t


def _pad2d(x, rows, cols):
    r, c = x.shape
    if r == rows and c == cols:
        return x
    return jnp.pad(x, ((0, rows - r), (0, cols - c)))


# ----------------------------------------------------------------------------
# Kernel 1: RBF kernel matrix  k[i, j] = amp * exp(gamma * ||X_i - Z_j||^2)
#           (optionally + noise on the global diagonal, fused for the fit path)
# ----------------------------------------------------------------------------
def _rbf_kernel(x_ref, xsq_ref, z_ref, zsq_ref, p_ref, k_ref, *, tm, tn, add_diag):
    # p_ref (SMEM): [amplitude_scale, gamma = -0.5 / length_scale, noise_scale]
    amp = p_ref[0]
    gamma = p_ref[1]
    x = x_ref[...]                                                   # (TM, D)
    z = z_ref[...]                                                   # (TN, D)
    # X @ Z^T via dot_general contracting feature dims (no materialized .T)
    cross = lax.dot_general(x, z, (((1,), (1,)), ((), ())),
                            preferred_element_type=jnp.float32)      # (TM, TN)
    sqdist = xsq_ref[...] + zsq_ref[...] - 2.0 * cross               # (TM,1)+(1,TN)
    k = amp * jnp.exp(gamma * sqdist)
    if add_diag:
        noise = p_ref[2]
        i = pl.program_id(0)
        j = pl.program_id(1)
        row = i * tm + lax.broadcasted_iota(jnp.int32, (tm, tn), 0)
        col = j * tn + lax.broadcasted_iota(jnp.int32, (tm, tn), 1)
        k = k + jnp.where(row == col, noise, jnp.float32(0.0))
    k_ref[...] = k


def rbf_kernel_mat(X, Z, amplitude_scale, length_scale, noise_scale=None,
                   tile_rows=256, tile_cols=512):
    """Dense RBF kernel matrix (optionally with fused noise*I on the diagonal)."""
    X = X.astype(jnp.float32)
    Z = Z.astype(jnp.float32)
    N, D = X.shape
    M = Z.shape[0]

    tm, n_pad = _choose_tile(N, tile_rows, 8)
    tn, m_pad = _choose_tile(M, tile_cols, 128)

    Xp = _pad2d(X, n_pad, D)
    Zp = _pad2d(Z, m_pad, D)
    # Hoisted row norms: O(N+M) once in the wrapper instead of a lane-sparse
    # D=4 reduction repeated in every (i, j) output tile.
    xsq = jnp.sum(Xp * Xp, axis=1, keepdims=True)           # (n_pad, 1) column
    zsq = jnp.sum(Zp * Zp, axis=1, keepdims=True).T         # (1, m_pad) lane-dense

    add_diag = noise_scale is not None
    gamma = -0.5 / length_scale                              # precomputed: no per-element divide
    noise = noise_scale if add_diag else jnp.float32(0.0)
    params = jnp.stack([amplitude_scale, gamma, noise]).astype(jnp.float32)

    grid = (n_pad // tm, m_pad // tn)
    kernel = functools.partial(_rbf_kernel, tm=tm, tn=tn, add_diag=add_diag)
    out = pl.pallas_call(
        kernel,
        out_shape=jax.ShapeDtypeStruct((n_pad, m_pad), jnp.float32),
        grid=grid,
        in_specs=[
            pl.BlockSpec((tm, D), lambda i, j: (i, 0)),
            pl.BlockSpec((tm, 1), lambda i, j: (i, 0)),
            pl.BlockSpec((tn, D), lambda i, j: (j, 0)),
            pl.BlockSpec((1, tn), lambda i, j: (0, j)),
            pl.BlockSpec(memory_space=pltpu.MemorySpace.SMEM),
        ],
        out_specs=pl.BlockSpec((tm, tn), lambda i, j: (i, j)),
        compiler_params=pltpu.CompilerParams(
            dimension_semantics=("parallel", "parallel"),
            vmem_limit_bytes=_VMEM_LIMIT,
        ),
    )(Xp, xsq, Zp, zsq, params)
    return out[:N, :M]


# ----------------------------------------------------------------------------
# Kernel 2: prediction head
#   mu  = alpha^T @ k                       -> lane-dense (1, M)
#   std = sqrt(max(amp + noise - colsum(v*v), 0))
#   Grid: (M tiles parallel, N tiles arbitrary reduction) with VMEM accumulators.
# ----------------------------------------------------------------------------
def _predict_kernel(k_ref, v_ref, alpha_ref, p_ref, mu_ref, std_ref, acc_mu, acc_ss):
    n = pl.program_id(1)

    @pl.when(n == 0)
    def _():
        acc_mu[...] = jnp.zeros_like(acc_mu)
        acc_ss[...] = jnp.zeros_like(acc_ss)

    k = k_ref[...]                                                   # (TR, TC)
    v = v_ref[...]                                                   # (TR, TC)
    a = alpha_ref[...]                                               # (1, TR)
    # mu tile += alpha_row @ k  (transpose-free, lane-dense (1, TC) result)
    acc_mu[...] += lax.dot_general(a, k, (((1,), (0,)), ((), ())),
                                   preferred_element_type=jnp.float32)
    acc_ss[...] += jnp.sum(v * v, axis=0, keepdims=True)             # colsum(v*v) partial

    @pl.when(n == pl.num_programs(1) - 1)
    def _():
        amp = p_ref[0]
        noise = p_ref[1]
        mu_ref[...] = acc_mu[...]
        var = jnp.maximum(amp + noise - acc_ss[...], jnp.float32(0.0))
        std_ref[...] = jnp.sqrt(var)


def gp_predict_head(k, alpha, v, amplitude_scale, noise_scale,
                    tile_rows=512, tile_cols=512):
    k = k.astype(jnp.float32)
    v = v.astype(jnp.float32)
    N, M = k.shape

    # 128 granule on the row axis keeps the (1, TR) alpha block lane-aligned.
    tr, n_pad = _choose_tile(N, tile_rows, 128)
    tc, m_pad = _choose_tile(M, tile_cols, 128)

    kp = _pad2d(k, n_pad, m_pad)
    vp = _pad2d(v, n_pad, m_pad)
    alpha_row = _pad2d(alpha.astype(jnp.float32).reshape(1, N), 1, n_pad)

    params = jnp.stack([amplitude_scale, noise_scale]).astype(jnp.float32)

    grid = (m_pad // tc, n_pad // tr)   # reduction (N) axis last
    mu, std = pl.pallas_call(
        _predict_kernel,
        out_shape=(
            jax.ShapeDtypeStruct((1, m_pad), jnp.float32),   # lane-dense mu
            jax.ShapeDtypeStruct((1, m_pad), jnp.float32),   # lane-dense std
        ),
        grid=grid,
        in_specs=[
            pl.BlockSpec((tr, tc), lambda m, n: (n, m)),
            pl.BlockSpec((tr, tc), lambda m, n: (n, m)),
            pl.BlockSpec((1, tr), lambda m, n: (0, n)),
            pl.BlockSpec(memory_space=pltpu.MemorySpace.SMEM),
        ],
        out_specs=(
            pl.BlockSpec((1, tc), lambda m, n: (0, m)),
            pl.BlockSpec((1, tc), lambda m, n: (0, m)),
        ),
        scratch_shapes=[
            pltpu.VMEM((1, tc), jnp.float32),
            pltpu.VMEM((1, tc), jnp.float32),
        ],
        compiler_params=pltpu.CompilerParams(
            dimension_semantics=("parallel", "arbitrary"),
            vmem_limit_bytes=_VMEM_LIMIT,
        ),
    )(kp, vp, alpha_row, params)

    mu = mu[0, :M].reshape(M, 1)   # torch returns (M, 1)
    std = std[0, :M]               # torch.sqrt(var) is 1-D (M,)
    return mu, std


# ----------------------------------------------------------------------------
# GP module (JAX port of the PyTorch nn.Module)
# ----------------------------------------------------------------------------
class GP:
    def __init__(self, length_scale=1.0, noise_scale=1.0, amplitude_scale=1.0):
        # deterministic parameter init, matching nn.Parameter(log(scale))
        self.length_scale_ = jnp.asarray(jnp.log(length_scale), jnp.float32)
        self.noise_scale_ = jnp.asarray(jnp.log(noise_scale), jnp.float32)
        self.amplitude_scale_ = jnp.asarray(jnp.log(amplitude_scale), jnp.float32)

    @property
    def length_scale(self):
        return jnp.exp(self.length_scale_)

    @property
    def noise_scale(self):
        return jnp.exp(self.noise_scale_)

    @property
    def amplitude_scale(self):
        return jnp.exp(self.amplitude_scale_)

    def fit(self, X, y):
        """X: (N, D), y: (N, 1)."""
        X = X.astype(jnp.float32)
        y = y.astype(jnp.float32)
        N, D = X.shape
        # K = amp * exp(-0.5 sqdist / ls) + noise * I  (noise*I fused in-kernel,
        # no eye(N) materialization / extra O(N^2) HBM pass)
        K = rbf_kernel_mat(X, X, self.amplitude_scale, self.length_scale,
                           noise_scale=self.noise_scale)
        # TODO(synk): Cholesky + triangular solves stay in JAX glue (sequential
        # factorizations have no clean data-parallel Pallas equivalent).
        L = jnp.linalg.cholesky(K)
        alpha = solve_triangular(
            L.T, solve_triangular(L, y, lower=True), lower=False)
        # NOTE: keeps the torch source's D*0.5*log(2*pi) term verbatim (the
        # standard GP log-marginal would use N/2; we stay faithful to the spec).
        marginal_likelihood = (
            -0.5 * (y.T @ alpha)
            - jnp.sum(jnp.log(jnp.diag(L)))
            - D * 0.5 * jnp.log(2.0 * jnp.pi)
        )
        self.X = X
        self.y = y
        self.L = L
        self.alpha = alpha
        self.K = K
        return marginal_likelihood

    def forward(self, x):
        """x: (M, D) test inputs. Returns (mu (M,1), std (M,))."""
        x = x.astype(jnp.float32)
        k = rbf_kernel_mat(self.X, x, self.amplitude_scale, self.length_scale)
        v = solve_triangular(self.L, k, lower=True)
        mu, std = gp_predict_head(
            k, self.alpha, v, self.amplitude_scale, self.noise_scale
        )
        return mu, std


# ----------------------------------------------------------------------------
# Reference (pure jnp) forward, for a sanity check.
# ----------------------------------------------------------------------------
def _reference(gp, x):
    amp, ls, noise = gp.amplitude_scale, gp.length_scale, gp.noise_scale
    X = gp.X
    Xsq = jnp.sum(X**2, axis=1, keepdims=True)
    K_ref = amp * jnp.exp(-0.5 * (Xsq + Xsq.T - 2.0 * X @ X.T) / ls) \
        + noise * jnp.eye(X.shape[0], dtype=jnp.float32)
    Zsq = jnp.sum(x**2, axis=1, keepdims=True)
    sqdist = Xsq + Zsq.T - 2.0 * X @ x.T
    k = amp * jnp.exp(-0.5 * sqdist / ls)
    v = jnp.linalg.solve(gp.L, k)
    mu = k.T @ gp.alpha
    var = amp + noise - jnp.diag(v.T @ v)
    return mu, jnp.sqrt(var), K_ref


if __name__ == "__main__":
    key = jax.random.PRNGKey(0)
    kX, kx, ky = jax.random.split(key, 3)

    N, D, M = 32, 4, 16                      # train points, feature dim, test points
    X_train = jax.random.normal(kX, (N, D), dtype=jnp.float32)
    y_train = jax.random.normal(ky, (N, 1), dtype=jnp.float32)
    x_test = jax.random.normal(kx, (M, D), dtype=jnp.float32)

    gp = GP(length_scale=1.0, noise_scale=1.0, amplitude_scale=1.0)
    ml = gp.fit(X_train, y_train)
    mu, std = gp.forward(x_test)
    jax.block_until_ready((ml, mu, std))

    mu_ref, std_ref, K_ref = _reference(gp, x_test)
    assert mu.shape == (M, 1) and std.shape == (M,)
    assert jnp.allclose(gp.K, K_ref, atol=1e-4, rtol=1e-4)
    assert jnp.allclose(mu, mu_ref, atol=1e-4, rtol=1e-4)
    assert jnp.allclose(std, std_ref, atol=1e-4, rtol=1e-4)

    print("KERNEL_OK")
</pallas_src>

<mosaic_0001>
module attributes {stable_mosaic.version = 11 : i64} {
  func.func @_rbf_kernel(%arg0: i32, %arg1: i32, %arg2: memref<32x4xf32, #tpu.memory_space<vmem>>, %arg3: memref<32x1xf32, #tpu.memory_space<vmem>>, %arg4: memref<128x4xf32, #tpu.memory_space<vmem>>, %arg5: memref<1x128xf32, #tpu.memory_space<vmem>>, %arg6: memref<3xf32, #tpu.memory_space<smem>>, %arg7: memref<32x128xf32, #tpu.memory_space<vmem>>) attributes {dimension_semantics = [#tpu.dimension_semantics<parallel>, #tpu.dimension_semantics<parallel>], iteration_bounds = array<i64: 1, 1>, scalar_prefetch = 0 : i64, scratch_operands = 0 : i64, tpu.core_type = #tpu.core_type<tc>, window_params = [{transform_indices = @transform_0, window_bounds = array<i64: 32, 4>}, {transform_indices = @transform_1, window_bounds = array<i64: 32, 1>}, {transform_indices = @transform_2, window_bounds = array<i64: 128, 4>}, {transform_indices = @transform_3, window_bounds = array<i64: 1, 128>}, {transform_indices = @transform_4, window_bounds = array<i64: 3>}, {transform_indices = @transform_5, window_bounds = array<i64: 32, 128>}]} {
    %c0 = arith.constant 0 : index
    %0 = memref.load %arg6[%c0] : memref<3xf32, #tpu.memory_space<smem>>
    %c1 = arith.constant 1 : index
    %1 = memref.load %arg6[%c1] : memref<3xf32, #tpu.memory_space<smem>>
    %c0_0 = arith.constant 0 : index
    %c0_1 = arith.constant 0 : index
    %2 = vector.load %arg2[%c0_0, %c0_1] : memref<32x4xf32, #tpu.memory_space<vmem>>, vector<32x4xf32>
    %c0_2 = arith.constant 0 : index
    %c0_3 = arith.constant 0 : index
    %3 = vector.load %arg4[%c0_2, %c0_3] : memref<128x4xf32, #tpu.memory_space<vmem>>, vector<128x4xf32>
    %cst = arith.constant dense<0.000000e+00> : vector<32x128xf32>
    %4 = tpu.matmul %2, %3, %cst {dimension_numbers = #tpu.dot_dimension_numbers<[1], [1], [0], [0], [0, 0, 1, 0], [], []>} : vector<32x4xf32>, vector<128x4xf32>, vector<32x128xf32> -> vector<32x128xf32>
    %c0_4 = arith.constant 0 : index
    %c0_5 = arith.constant 0 : index
    %5 = vector.load %arg3[%c0_4, %c0_5] : memref<32x1xf32, #tpu.memory_space<vmem>>, vector<32x1xf32>
    %c0_6 = arith.constant 0 : index
    %c0_7 = arith.constant 0 : index
    %6 = vector.load %arg5[%c0_6, %c0_7] : memref<1x128xf32, #tpu.memory_space<vmem>>, vector<1x128xf32>
    %7 = vector.broadcast %5 : vector<32x1xf32> to vector<32x128xf32>
    %8 = vector.broadcast %6 : vector<1x128xf32> to vector<32x128xf32>
    %9 = arith.addf %7, %8 : vector<32x128xf32>
    %cst_8 = arith.constant 2.000000e+00 : f32
    %10 = vector.broadcast %cst_8 : f32 to vector<32x128xf32>
    %11 = arith.mulf %10, %4 : vector<32x128xf32>
    %12 = arith.subf %9, %11 : vector<32x128xf32>
    %13 = vector.broadcast %1 : f32 to vector<32x128xf32>
    %14 = arith.mulf %13, %12 : vector<32x128xf32>
    %15 = math.exp %14 : vector<32x128xf32>
    %16 = vector.broadcast %0 : f32 to vector<32x128xf32>
    %17 = arith.mulf %16, %15 : vector<32x128xf32>
    %c2 = arith.constant 2 : index
    %18 = memref.load %arg6[%c2] : memref<3xf32, #tpu.memory_space<smem>>
    %c32_i32 = arith.constant 32 : i32
    %19 = arith.muli %arg0, %c32_i32 : i32
    %20 = tpu.iota {dimensions = array<i32: 0>} : vector<32x128xi32>
    %21 = vector.broadcast %19 : i32 to vector<32x128xi32>
    %22 = arith.addi %21, %20 : vector<32x128xi32>
    %c128_i32 = arith.constant 128 : i32
    %23 = arith.muli %arg1, %c128_i32 : i32
    %24 = tpu.iota {dimensions = array<i32: 1>} : vector<32x128xi32>
    %25 = vector.broadcast %23 : i32 to vector<32x128xi32>
    %26 = arith.addi %25, %24 : vector<32x128xi32>
    %27 = arith.cmpi eq, %22, %26 : vector<32x128xi32>
    %cst_9 = arith.constant 0.000000e+00 : f32
    %28 = vector.broadcast %18 : f32 to vector<32x128xf32>
    %29 = vector.broadcast %cst_9 : f32 to vector<32x128xf32>
    %30 = arith.select %27, %28, %29 : vector<32x128xi1>, vector<32x128xf32>
    %31 = arith.addf %17, %30 : vector<32x128xf32>
    %c0_10 = arith.constant 0 : index
    %c0_11 = arith.constant 0 : index
    %32 = vector.load %arg7[%c0_10, %c0_11] : memref<32x128xf32, #tpu.memory_space<vmem>>, vector<32x128xf32>
    tpu.vector_store %arg7[%c0_10, %c0_11], %31 {strides = array<i32>} : memref<32x128xf32, #tpu.memory_space<vmem>>, vector<32x128xf32>,
    return
  }
  func.func @transform_0(%arg0: i32, %arg1: i32) -> (i32, i32) {
    %c0_i32 = arith.constant 0 : i32
    %c0_i32_0 = arith.constant 0 : i32
    return %arg0, %c0_i32 : i32, i32
  }
  func.func @transform_1(%arg0: i32, %arg1: i32) -> (i32, i32) {
    %c0_i32 = arith.constant 0 : i32
    %c0_i32_0 = arith.constant 0 : i32
    return %arg0, %c0_i32 : i32, i32
  }
  func.func @transform_2(%arg0: i32, %arg1: i32) -> (i32, i32) {
    %c0_i32 = arith.constant 0 : i32
    %c0_i32_0 = arith.constant 0 : i32
    return %arg1, %c0_i32 : i32, i32
  }
  func.func @transform_3(%arg0: i32, %arg1: i32) -> (i32, i32) {
    %c0_i32 = arith.constant 0 : i32
    %c0_i32_0 = arith.constant 0 : i32
    return %c0_i32, %arg1 : i32, i32
  }
  func.func @transform_4(%arg0: i32, %arg1: i32) -> i32 {
    %c0_i32 = arith.constant 0 : i32
    %c0_i32_0 = arith.constant 0 : i32
    return %c0_i32 : i32
  }
  func.func @transform_5(%arg0: i32, %arg1: i32) -> (i32, i32) {
    %c0_i32 = arith.constant 0 : i32
    return %arg0, %arg1 : i32, i32
  }
}

</mosaic_0001>

<llo_original>
// kernel: tpu_custom_call.1
$region0: #{tpu_custom_call.1}
  #allocation0 [shape = 'u32[]', space=smem, size = 0x4, offset = 0x4, fixed_abs, tag = 'smem constant byte address 0x4 - core index']
  #allocation1 [shape = 'u32[144,128]{1,0:T(1,128)}', space=vmem, size = 0x12000, scoped, tag = 'internal scratch']
  %s0 = inlined_call_operand.vmem [shape: f32[32,4], index: 0, kind: input, shape index: {}]
  %s1 = inlined_call_operand.vmem [shape: f32[32,1], index: 1, kind: input, shape index: {}]
  %s2 = inlined_call_operand.vmem [shape: f32[128,4], index: 2, kind: input, shape index: {}]
  %s3 = inlined_call_operand.vmem [shape: f32[1,128], index: 3, kind: input, shape index: {}]
  %s4 = inlined_call_operand.vmem [shape: f32[3], index: 4, kind: input, shape index: {}]
  %s5 = inlined_call_operand.hbm [shape: f32[32,128], index: 5, kind: output, shape index: {}]
  %s6 = sld [smem:[#allocation0]]
  $region34: #{tpu_custom_call.1} parent=0
    _
  %s8 = ssub.s32 1, %s6
  %s9 = scalar_select 0, %s8, %s6
  $region1: #{tpu_custom_call.1} parent=0
    #allocation2 [shape = 'u8[512]{0}', space=smem, size = 0x200, scoped, tag = 'input window, operand 4, single buffered']
    #allocation3 [shape = 's32[1]{0}', space=sflag, size = 0x4, scoped, tag = 'scoped memory for tpu_custom_call.1']
    #allocation4 [shape = 's32[1]{0}', space=sflag, size = 0x4, scoped, tag = 'scoped memory for tpu_custom_call.1']
    #allocation5 [shape = 'u8[16384]{0}', space=vmem, size = 0x4000, scoped, tag = 'output window, operand 0, single buffered']
    %10 = vsyncpa [#allocation4], 0
    %11 = vsyncpa [#allocation3], 0
    // Predicated region
    $region2: #{tpu_custom_call.1} parent=1 // pred_check
      _
    $region3: #{tpu_custom_call.1} parent=1 // pred_check_branch
      %13 = sbr.rel (0) target = $region5
    $region4: #{tpu_custom_call.1} parent=1 // pred_region
      _
    $region5: #{tpu_custom_call.1} parent=1 // pred_fallthru
      _
    // Predicated region
    $region6: #{tpu_custom_call.1} parent=1 // pred_check
      _
    $region7: #{tpu_custom_call.1} parent=1 // pred_check_branch
      %15 = sbr.rel (0) target = $region9
    $region8: #{tpu_custom_call.1} parent=1 // pred_region
      _
    $region9: #{tpu_custom_call.1} parent=1 // pred_fallthru
      _
    // Predicated region
    $region10: #{tpu_custom_call.1} parent=1 // pred_check
      _
    $region11: #{tpu_custom_call.1} parent=1 // pred_check_branch
      %17 = sbr.rel (0) target = $region13
    $region12: #{tpu_custom_call.1} parent=1 // pred_region
      _
    $region13: #{tpu_custom_call.1} parent=1 // pred_fallthru
      _
    // Predicated region
    $region14: #{tpu_custom_call.1} parent=1 // pred_check
      _
    $region15: #{tpu_custom_call.1} parent=1 // pred_check_branch
      %19 = sbr.rel (0) target = $region17
    $region16: #{tpu_custom_call.1} parent=1 // pred_region
      _
    $region17: #{tpu_custom_call.1} parent=1 // pred_fallthru
      _
    // Predicated region
    $region18: #{tpu_custom_call.1} parent=1 // pred_check
      _
    $region19: #{tpu_custom_call.1} parent=1 // pred_check_branch
      %21 = sbr.rel (0) target = $region21
    $region20: #{tpu_custom_call.1} parent=1 // pred_region
      %s23 = ssub.s32 16, 16
      %24 = vsyncadd [#allocation4], %s23
      %s26 = sshll.u32 %s4, 4
      %s27 = int_to_ptr.vmem [resolvable:$true] %s26
      %29 = dma.vmem_to_smem %s27, 16, [#allocation2], [#allocation4]
    $region21: #{tpu_custom_call.1} parent=1 // pred_fallthru
      _
    // Predicated region
    $region22: #{tpu_custom_call.1} parent=1 // pred_check
      _
    $region23: #{tpu_custom_call.1} parent=1 // pred_check_branch
      %31 = sbr.rel (0) target = $region25
    $region24: #{tpu_custom_call.1} parent=1 // pred_region
      %32 = dma.done [#allocation4], 16
    $region25: #{tpu_custom_call.1} parent=1 // pred_fallthru
      _
    %33 = sfence
    %s34 = sld [smem:[#allocation2]]
    %s35 = sld [smem:[#allocation2 + $0x1]]
    %v36 = vld [vmem:[%s0] sm:$0xff]
    %v37 = vld [vmem:[%s0 + $0x8] sm:$0xff]
    %v38 = vld [vmem:[%s0 + $0x10] sm:$0xff]
    %v39 = vld [vmem:[%s0 + $0x18] sm:$0xff]
    %v40 = vld [vmem:[%s2] sm:$0xff]
    %v41 = vld [vmem:[%s2 + $0x8] sm:$0xff]
    %v42 = vld [vmem:[%s2 + $0x10] sm:$0xff]
    %v43 = vld [vmem:[%s2 + $0x18] sm:$0xff]
    %v44 = vld [vmem:[%s2 + $0x20] sm:$0xff]
    %v45 = vld [vmem:[%s2 + $0x28] sm:$0xff]
    %v46 = vld [vmem:[%s2 + $0x30] sm:$0xff]
    %v47 = vld [vmem:[%s2 + $0x38] sm:$0xff]
    %v48 = vld [vmem:[%s2 + $0x40] sm:$0xff]
    %v49 = vld [vmem:[%s2 + $0x48] sm:$0xff]
    %v50 = vld [vmem:[%s2 + $0x50] sm:$0xff]
    %v51 = vld [vmem:[%s2 + $0x58] sm:$0xff]
    %v52 = vld [vmem:[%s2 + $0x60] sm:$0xff]
    %v53 = vld [vmem:[%s2 + $0x68] sm:$0xff]
    %v54 = vld [vmem:[%s2 + $0x70] sm:$0xff]
    %v55 = vld [vmem:[%s2 + $0x78] sm:$0xff]
    %vm56 = vcmask 31744
    %v58 = vsel %vm56, %v36, 0
    %v61 = vsel %vm56, %v37, 0
    %v64 = vsel %vm56, %v38, 0
    %v67 = vsel %vm56, %v39, 0
    %v70 = vsel %vm56, %v40, 0
    %v73 = vsel %vm56, %v41, 0
    %v76 = vsel %vm56, %v42, 0
    %v79 = vsel %vm56, %v43, 0
    %v82 = vsel %vm56, %v44, 0
    %v85 = vsel %vm56, %v45, 0
    %v88 = vsel %vm56, %v46, 0
    %v91 = vsel %vm56, %v47, 0
    %v94 = vsel %vm56, %v48, 0
    %v97 = vsel %vm56, %v49, 0
    %v100 = vsel %vm56, %v50, 0
    %v103 = vsel %vm56, %v51, 0
    %v106 = vsel %vm56, %v52, 0
    %v109 = vsel %vm56, %v53, 0
    %v112 = vsel %vm56, %v54, 0
    %v115 = vsel %vm56, %v55, 0
    %117 = vmatprep.subr.mxu0 0.0
    %118 = vmatpush1.xpose.msra.mxu0 %v70
    %119 = vmatprep.subr.mxu0 0.0
    %120 = vmatpush1.xpose.msra.mxu0 %v73
    %121 = vmatprep.subr.mxu0 0.0
    %122 = vmatpush1.xpose.msra.mxu0 %v76
    %123 = vmatprep.subr.mxu0 0.0
    %124 = vmatpush1.xpose.msra.mxu0 %v79
    %125 = vmatprep.subr.mxu0 0.0
    %126 = vmatpush1.xpose.msra.mxu0 %v82
    %127 = vmatprep.subr.mxu0 0.0
    %128 = vmatpush1.xpose.msra.mxu0 %v85
    %129 = vmatprep.subr.mxu0 0.0
    %130 = vmatpush1.xpose.msra.mxu0 %v88
    %131 = vmatprep.subr.mxu0 0.0
    %132 = vmatpush1.xpose.msra.mxu0 %v91
    %133 = vmatprep.subr.mxu0 0.0
    %134 = vmatpush1.xpose.msra.mxu0 %v94
    %135 = vmatprep.subr.mxu0 0.0
    %136 = vmatpush1.xpose.msra.mxu0 %v97
    %137 = vmatprep.subr.mxu0 0.0
    %138 = vmatpush1.xpose.msra.mxu0 %v100
    %139 = vmatprep.subr.mxu0 0.0
    %140 = vmatpush1.xpose.msra.mxu0 %v103
    %141 = vmatprep.subr.mxu0 0.0
    %142 = vmatpush1.xpose.msra.mxu0 %v106
    %143 = vmatprep.subr.mxu0 0.0
    %144 = vmatpush1.xpose.msra.mxu0 %v109
    %145 = vmatprep.subr.mxu0 0.0
    %146 = vmatpush1.xpose.msra.mxu0 %v112
    %147 = vmatprep.subr.mxu0 0.0
    %148 = vmatpush1.xpose.msra.mxu0 %v115
    %149 = vmatprep.subr.mxu0 0.0
    %150 = vmatpush1.xpose.msra.mxu0 0.0
    %151 = vmatprep.subr.mxu0 0.0
    %152 = vmatpush1.xpose.msra.mxu0 0.0
    %153 = vmatprep.subr.mxu0 0.0
    %154 = vmatpush1.xpose.msra.mxu0 0.0
    %155 = vmatprep.subr.mxu0 0.0
    %156 = vmatpush1.xpose.msra.mxu0 0.0
    %157 = vmatprep.subr.mxu0 0.0
    %158 = vmatpush1.xpose.msra.mxu0 0.0
    %159 = vmatprep.subr.mxu0 0.0
    %160 = vmatpush1.xpose.msra.mxu0 0.0
    %161 = vmatprep.subr.mxu0 0.0
    %162 = vmatpush1.xpose.msra.mxu0 0.0
    %163 = vmatprep.subr.mxu0 0.0
    %164 = vmatpush1.xpose.msra.mxu0 0.0
    %165 = vmatprep.subr.mxu0 0.0
    %166 = vmatpush1.xpose.msra.mxu0 0.0
    %167 = vmatprep.subr.mxu0 0.0
    %168 = vmatpush1.xpose.msra.mxu0 0.0
    %169 = vmatprep.subr.mxu0 0.0
    %170 = vmatpush1.xpose.msra.mxu0 0.0
    %171 = vmatprep.subr.mxu0 0.0
    %172 = vmatpush1.xpose.msra.mxu0 0.0
    %173 = vmatprep.subr.mxu0 0.0
    %174 = vmatpush1.xpose.msra.mxu0 0.0
    %175 = vmatprep.subr.mxu0 0.0
    %176 = vmatpush1.xpose.msra.mxu0 0.0
    %177 = vmatprep.subr.mxu0 0.0
    %178 = vmatpush1.xpose.msra.mxu0 0.0
    %179 = vmatprep.subr.mxu0 0.0
    %180 = vmatpush1.xpose.msra.mxu0 0.0
    %181 = vmatprep.mubr.f32.mxu0 0.0
    %182 = vmatmul.mubr.f32.gmra.mrb[0].mxu0 %v58
    %v183 = vpop.f32.mrb[0].mxu0
    %v184 = vadd.f32 0.0, %v183
    %v185 = vpop.f32.mrb[0].mxu0
    %186 = vmatprep.mubr.f32.mxu0 0.0
    %187 = vmatmul.mubr.f32.gmra.mrb[0].mxu0 %v61
    %v188 = vpop.f32.mrb[0].mxu0
    %v189 = vadd.f32 0.0, %v188
    %v190 = vpop.f32.mrb[0].mxu0
    %191 = vmatprep.mubr.f32.mxu0 0.0
    %192 = vmatmul.mubr.f32.gmra.mrb[0].mxu0 %v64
    %v193 = vpop.f32.mrb[0].mxu0
    %v194 = vadd.f32 0.0, %v193
    %v195 = vpop.f32.mrb[0].mxu0
    %196 = vmatprep.mubr.f32.mxu0 0.0
    %197 = vmatmul.mubr.f32.gmra.mrb[0].mxu0 %v67
    %v198 = vpop.f32.mrb[0].mxu0
    %v199 = vadd.f32 0.0, %v198
    %v200 = vpop.f32.mrb[0].mxu0
    %201 = vdwg.mxu0
    %v202 = vld [vmem:[%s1] sm:$0xff]
    %v203 = vld [vmem:[%s1 + $0x8] sm:$0xff]
    %v204 = vld [vmem:[%s1 + $0x10] sm:$0xff]
    %v205 = vld [vmem:[%s1 + $0x18] sm:$0xff]
    %v206 = vld [vmem:[%s3] sm:$0x1]
    %208 = vset.pattern.permute.xlu0 0
    %209 = vperm.xlu0 %208, %v202
    %v210 = vpop.permute.xlu0 %209
    %213 = vset.pattern.permute.xlu0 0
    %214 = vperm.xlu0 %213, %v203
    %v215 = vpop.permute.xlu0 %214
    %218 = vset.pattern.permute.xlu0 0
    %219 = vperm.xlu0 %218, %v204
    %v220 = vpop.permute.xlu0 %219
    %223 = vset.pattern.permute.xlu0 0
    %224 = vperm.xlu0 %223, %v205
    %v225 = vpop.permute.xlu0 %224
    %v228 = vlaneseq
    %v229 = vshrl.u32 %v228, 7
    %v230 = vsub.s32 0, %v229
    %v231 = vrot.slane %v206, %v230
    %v233 = vadd.f32 %v210, %v231
    %v234 = vadd.f32 %v215, %v231
    %v235 = vadd.f32 %v220, %v231
    %v236 = vadd.f32 %v225, %v231
    %v237 = vmul.f32 %v184, 2.0
    %v238 = vmul.f32 %v189, 2.0
    %v239 = vmul.f32 %v194, 2.0
    %v240 = vmul.f32 %v199, 2.0
    %v241 = vsub.f32 %v233, %v237
    %v242 = vsub.f32 %v234, %v238
    %v243 = vsub.f32 %v235, %v239
    %v244 = vsub.f32 %v236, %v240
    %v245 = vstv %s35
    %v246 = vmul.f32 %v245, %v241
    %v247 = vmul.f32 %v245, %v242
    %v248 = vmul.f32 %v245, %v243
    %v249 = vmul.f32 %v245, %v244
    %v250 = vmul.f32 %v246, 1.442695
    %v251 = vpow.pop %v250
    %v252 = vmul.f32 %v247, 1.442695
    %v253 = vpow.pop %v252
    %v254 = vmul.f32 %v248, 1.442695
    %v255 = vpow.pop %v254
    %v256 = vmul.f32 %v249, 1.442695
    %v257 = vpow.pop %v256
    %v258 = vstv %s34
    %v259 = vmul.f32 %v258, %v251
    %v260 = vmul.f32 %v258, %v253
    %v261 = vmul.f32 %v258, %v255
    %v262 = vmul.f32 %v258, %v257
    %s263 = sld [smem:[#allocation2 + $0x2]]
    %s264 = smul.u32 0, 32
    %v265 = vlaneseq
    %v266 = vshrl.u32 %v265, 7
    %v267 = vadd.s32 %v266, 8
    %v268 = vadd.s32 %v266, 16
    %v269 = vadd.s32 %v266, 24
    %v270 = vstv %s264
    %v271 = vadd.s32 %v270, %v266
    %v272 = vadd.s32 %v270, %v267
    %v273 = vadd.s32 %v270, %v268
    %v274 = vadd.s32 %v270, %v269
    %s275 = smul.u32 0, 128
    %v276 = vlaneseq
    %v277 = vand.u32 %v276, 127
    %v278 = vstv %s275
    %v279 = vadd.s32 %v278, %v277
    %vm280 = vcmp.eq.s32.totalorder %v271, %v279
    %vm281 = vcmp.eq.s32.totalorder %v272, %v279
    %vm282 = vcmp.eq.s32.totalorder %v273, %v279
    %vm283 = vcmp.eq.s32.totalorder %v274, %v279
    %v284 = vstv %s263
    %v285 = vsel %vm280, %v284, 0.0
    %v286 = vsel %vm281, %v284, 0.0
    %v287 = vsel %vm282, %v284, 0.0
    %v288 = vsel %vm283, %v284, 0.0
    %v289 = vadd.f32 %v259, %v285
    %v290 = vadd.f32 %v260, %v286
    %v291 = vadd.f32 %v261, %v287
    %v292 = vadd.f32 %v262, %v288
    %293 = vst [vmem:[#allocation5] sm:$0xff] %v289
    %294 = vst [vmem:[#allocation5 + $0x8] sm:$0xff] %v290
    %295 = vst [vmem:[#allocation5 + $0x10] sm:$0xff] %v291
    %296 = vst [vmem:[#allocation5 + $0x18] sm:$0xff] %v292
    // Predicated region
    $region26: #{tpu_custom_call.1} parent=1 // pred_check
      _
    $region27: #{tpu_custom_call.1} parent=1 // pred_check_branch
      %298 = sbr.rel (0) target = $region29
    $region28: #{tpu_custom_call.1} parent=1 // pred_region
      %s300 = ssub.s32 512, 512
      %301 = vsyncadd [#allocation3], %s300
      %s302 = sshll.u32 [#allocation5], 4
      %s303 = int_to_ptr.vmem [resolvable:$true] %s302
      %308 = dma.vmem_to_hbm [thread:$0]  %s303, 512, %s5, [#allocation3], 128, 128, 8
    $region29: #{tpu_custom_call.1} parent=1 // pred_fallthru
      _
    // Predicated region
    $region30: #{tpu_custom_call.1} parent=1 // pred_check
      _
    $region31: #{tpu_custom_call.1} parent=1 // pred_check_branch
      %310 = sbr.rel (0) target = $region33
    $region32: #{tpu_custom_call.1} parent=1 // pred_region
      %311 = dma.done [#allocation3], 512
    $region33: #{tpu_custom_call.1} parent=1 // pred_fallthru
      _
    %312 = vsyncpa [#allocation3], 1
    %313 = vsyncpa [#allocation4], 1

</llo_original>
